<compile_context>
chip_gen: v7x
topology: tpu7x:2x2x1
jax: 0.10.0
libtpu: 0.0.40
codegen_flags: <defaults>
</compile_context>

<pallas_src>
import math
from functools import partial

import jax
import jax.numpy as jnp
from jax import lax
from jax.experimental import pallas as pl
from jax.experimental.pallas import tpu as pltpu

N_VEC = 8
NEG_SLOPE = 0.01                      # F.leaky_relu default
SINKHORN_BLUR = 0.05
SINKHORN_P = 2
SINKHORN_EPS = SINKHORN_BLUR ** SINKHORN_P
SINKHORN_ITERS = 64
NORM_EPS = 1e-12                      # added inside rsqrt; reference divides by raw norm
VMEM_LIMIT = 48 * 1024 * 1024         # explicit scoped-VMEM limit with headroom for v7x (64 MiB)


def _round_up(a, b):
    return (a + b - 1) // b * b


def _pick_tile(n_items, target):
    # biggest tile <= target, multiple of 8, that covers small problems without huge padding
    return min(target, _round_up(max(n_items, 1), 8))


def _lrelu(x):
    return jnp.where(x >= 0, x, NEG_SLOPE * x)


def _row_normalize(x):
    ss = jnp.sum(x * x, axis=-1, keepdims=True)
    return x * lax.rsqrt(ss + jnp.float32(NORM_EPS))


# ----------------------- L2 normalize along last dim (CloudEncoder tail) -------------------
def _normalize_kernel(x_ref, o_ref):
    x = x_ref[...].astype(jnp.float32)                       # (TR, d)
    o_ref[...] = _row_normalize(x).astype(o_ref.dtype)


def l2_normalize(x, block_rows=1024):
    B, n, d = x.shape
    rows = B * n
    xf = x.reshape(rows, d)
    tr = _pick_tile(rows, block_rows)
    rows_pad = _round_up(rows, tr)
    if rows_pad != rows:
        xf = jnp.pad(xf, ((0, rows_pad - rows), (0, 0)))
    out = pl.pallas_call(
        _normalize_kernel,
        out_shape=jax.ShapeDtypeStruct((rows_pad, d), x.dtype),
        grid=(rows_pad // tr,),
        in_specs=[pl.BlockSpec((tr, d), lambda i: (i, 0))],
        out_specs=pl.BlockSpec((tr, d), lambda i: (i, 0)),
        compiler_params=pltpu.CompilerParams(
            dimension_semantics=("parallel",), vmem_limit_bytes=VMEM_LIMIT),
    )(xf)
    return out[:rows].reshape(B, n, d)


# ----------------------- CloudProjection: in-kernel relation gather + normalize ------------
def _projection_kernel(rels_ref, x_ref, m_ref, o_ref):
    del rels_ref                                             # only used by the index_maps
    x = x_ref[0].astype(jnp.float32)                         # (n_vec, d)
    m = m_ref[0].astype(jnp.float32)                         # (d, d) -- gathered from HBM table
    y = jnp.dot(x, m, preferred_element_type=jnp.float32)
    o_ref[0] = _row_normalize(y).astype(o_ref.dtype)


def cloud_projection(embeds, rels, proj_mats):
    B, n, d = embeds.shape
    rels = rels.astype(jnp.int32)
    return pl.pallas_call(
        _projection_kernel,
        out_shape=jax.ShapeDtypeStruct((B, n, d), embeds.dtype),
        grid_spec=pltpu.PrefetchScalarGridSpec(
            num_scalar_prefetch=1,
            grid=(B,),
            in_specs=[pl.BlockSpec((1, n, d), lambda b, rels: (b, 0, 0)),
                      pl.BlockSpec((1, d, d), lambda b, rels: (rels[b], 0, 0))],
            out_specs=pl.BlockSpec((1, n, d), lambda b, rels: (b, 0, 0)),
        ),
        compiler_params=pltpu.CompilerParams(
            dimension_semantics=("parallel",), vmem_limit_bytes=VMEM_LIMIT),
    )(rels, embeds, proj_mats)


# ----------------------- CloudIntersection (2-way), batched over queries -------------------
def _intersection_kernel(x1_ref, x2_ref, pre_ref, post_ref, pre2_ref, post2f_ref, o_ref):
    tb, n, d = x1_ref.shape
    pre = pre_ref[...].astype(jnp.float32)
    post = post_ref[...].astype(jnp.float32)
    pre2 = pre2_ref[...].astype(jnp.float32)
    post2f = post2f_ref[...].astype(jnp.float32)             # (d, n_vec*d)

    def agg(x_ref):
        x = x_ref[...].astype(jnp.float32).reshape(tb * n, d)
        e = _lrelu(jnp.dot(x, pre, preferred_element_type=jnp.float32))
        a = jnp.max(e.reshape(tb, n, d), axis=1)             # intra_cloud_agg = max over n_vec
        return _lrelu(jnp.dot(a, post, preferred_element_type=jnp.float32))   # (tb, d)

    inter = 0.5 * (agg(x1_ref) + agg(x2_ref))                # inter_cloud_agg = mean of 2 clouds
    inter = _lrelu(jnp.dot(inter, pre2, preferred_element_type=jnp.float32))
    out = jnp.dot(inter, post2f, preferred_element_type=jnp.float32)           # (tb, n_vec*d)
    out = out.reshape(tb, n, d)                              # row v = inter @ post_mats2[v]
    o_ref[...] = _row_normalize(out).astype(o_ref.dtype)


def cloud_intersection(e1, e2, pre_mats, post_mats, pre_mats2, post2f, block=128):
    B, n, d = e1.shape
    tb = _pick_tile(B, block)
    bpad = _round_up(B, tb)
    if bpad != B:
        pad = ((0, bpad - B), (0, 0), (0, 0))
        e1 = jnp.pad(e1, pad)
        e2 = jnp.pad(e2, pad)
    out = pl.pallas_call(
        _intersection_kernel,
        out_shape=jax.ShapeDtypeStruct((bpad, n, d), e1.dtype),
        grid=(bpad // tb,),
        in_specs=[pl.BlockSpec((tb, n, d), lambda i: (i, 0, 0)),
                  pl.BlockSpec((tb, n, d), lambda i: (i, 0, 0)),
                  pl.BlockSpec((d, d), lambda i: (0, 0)),
                  pl.BlockSpec((d, d), lambda i: (0, 0)),
                  pl.BlockSpec((d, d), lambda i: (0, 0)),
                  pl.BlockSpec((d, n * d), lambda i: (0, 0))],
        out_specs=pl.BlockSpec((tb, n, d), lambda i: (i, 0, 0)),
        compiler_params=pltpu.CompilerParams(
            dimension_semantics=("parallel",), vmem_limit_bytes=VMEM_LIMIT),
    )(e1, e2, pre_mats, post_mats, pre_mats2, post2f)
    return out[:B]


# ----------------------- Score_Func: Sinkhorn divergence (lane-dense batch) ----------------
def _to_batch_last(c):
    # (TB, n, m) -> (n, m, TB) using per-row 2-D transposes
    n = c.shape[1]
    return jnp.stack([jnp.transpose(c[:, i, :]) for i in range(n)], axis=0)


def _swap_last_two(c):
    # (a, b, e) -> (a, e, b) using per-slice 2-D transposes
    a = c.shape[0]
    return jnp.stack([jnp.transpose(c[i]) for i in range(a)], axis=0)


def _cost_pair(x, y):
    # x, y: (TB, n, d) f32 -> cost[i, j, t] = 0.5*|x[t,i]-y[t,j]|^2 as (n, n, TB)
    xy = jnp.einsum('tik,tjk->tij', x, y, preferred_element_type=jnp.float32)   # (TB, n, n)
    x2 = jnp.sum(x * x, axis=-1)                                                # (TB, n)
    y2 = jnp.sum(y * y, axis=-1)
    c = 0.5 * (x2[:, :, None] + y2[:, None, :]) - xy
    return _to_batch_last(c)


def _cost_cross(x, y):
    # x: (n, d); y: (TN, n, d) f32 -> cost[i, j, t] as (n, n, TN)
    tn, n, d = y.shape
    xy = lax.dot_general(x, y.reshape(tn * n, d), (((1,), (1,)), ((), ())),
                         preferred_element_type=jnp.float32)                    # (n_i, TN*n_j)
    xy = xy.reshape(n, tn, n)                                                   # [i, t, j]
    x2 = jnp.sum(x * x, axis=-1, keepdims=True)                                 # (n, 1)
    y2 = jnp.sum(y * y, axis=-1)                                                # (TN, n)
    c = 0.5 * (x2[:, :, None] + y2[None, :, :]) - xy                            # [i, t, j]
    return _swap_last_two(c)                                                    # [i, j, t]


def _ot_from_costs(ct):
    # ct: (S, n, n, TILE) cost[s, i, j, t]; fixed-eps log-domain Sinkhorn, batch on lanes.
    # TODO(synk): geomloss SamplesLoss('sinkhorn', blur=0.05, p=2) uses eps-annealing and a
    # symmetric debiased solver; fixed eps + 64 iterations is used instead.
    s, n, _, tb = ct.shape
    eps = jnp.float32(SINKHORN_EPS)
    inv_eps = jnp.float32(1.0 / SINKHORN_EPS)
    logw = jnp.float32(-math.log(n))                          # uniform point weights

    def one_round(f, g):
        m = (g[:, None, :, :] - ct) * inv_eps + logw          # (S, i, j, TILE)
        mx = jnp.max(m, axis=2)
        f = -eps * (jnp.log(jnp.sum(jnp.exp(m - mx[:, :, None, :]), axis=2)) + mx)
        m = (f[:, :, None, :] - ct) * inv_eps + logw
        mx = jnp.max(m, axis=1)
        g = -eps * (jnp.log(jnp.sum(jnp.exp(m - mx[:, None, :, :]), axis=1)) + mx)
        return f, g

    def body(_, fg):
        f, g = one_round(*fg)
        return one_round(f, g)                                # manual 2x unroll of the hot loop

    f0 = jnp.zeros((s, n, tb), jnp.float32)
    g0 = jnp.zeros((s, n, tb), jnp.float32)
    f, g = lax.fori_loop(0, SINKHORN_ITERS // 2, body, (f0, g0))
    return (jnp.sum(f, axis=1) + jnp.sum(g, axis=1)) * jnp.float32(1.0 / n)     # (S, TILE)


def _sinkhorn_pair_kernel(x_ref, y_ref, o_ref, *, normalize_x, normalize_y):
    x = x_ref[...].astype(jnp.float32)                        # (TB, n, d)
    y = y_ref[...].astype(jnp.float32)
    if normalize_x:
        x = _row_normalize(x)
    if normalize_y:
        y = _row_normalize(y)
    ct = jnp.stack([_cost_pair(x, y), _cost_pair(x, x), _cost_pair(y, y)], axis=0)
    ots = _ot_from_costs(ct)                                  # (3, TB)
    o_ref[0] = ots[0:1] - 0.5 * (ots[1:2] + ots[2:3])         # debiased divergence


def _sinkhorn_self_kernel(x_ref, o_ref, *, normalize_x):
    x = x_ref[...].astype(jnp.float32)
    if normalize_x:
        x = _row_normalize(x)
    o_ref[0] = _ot_from_costs(_cost_pair(x, x)[None])         # (1, TB)


def _sinkhorn_batchneg_kernel(x_ref, y_ref, o_ref, *, normalize_x, normalize_y):
    x = x_ref[0].astype(jnp.float32)                          # (n, d) query cloud (resident)
    y = y_ref[0].astype(jnp.float32)                          # (TN, n, d) tile of negatives
    if normalize_x:
        x = _row_normalize(x)
    if normalize_y:
        y = _row_normalize(y)
    ct = jnp.stack([_cost_cross(x, y), _cost_pair(y, y)], axis=0)
    ots = _ot_from_costs(ct)                                  # (2, TN)
    o_ref[0, 0] = ots[0:1] - 0.5 * ots[1:2]                   # OT(x,y) - 0.5*OT(y,y)


def _sinkhorn_pair(x, y, *, normalize_x=False, normalize_y=False, block=128):
    N, n, d = x.shape
    tb = _pick_tile(N, block)
    npad = _round_up(N, tb)
    if npad != N:
        pad = ((0, npad - N), (0, 0), (0, 0))
        x = jnp.pad(x, pad)
        y = jnp.pad(y, pad)
    tiles = npad // tb
    out = pl.pallas_call(
        partial(_sinkhorn_pair_kernel, normalize_x=normalize_x, normalize_y=normalize_y),
        out_shape=jax.ShapeDtypeStruct((tiles, 1, tb), jnp.float32),
        grid=(tiles,),
        in_specs=[pl.BlockSpec((tb, n, d), lambda i: (i, 0, 0)),
                  pl.BlockSpec((tb, n, d), lambda i: (i, 0, 0))],
        out_specs=pl.BlockSpec((1, 1, tb), lambda i: (i, 0, 0)),
        compiler_params=pltpu.CompilerParams(
            dimension_semantics=("parallel",), vmem_limit_bytes=VMEM_LIMIT),
    )(x, y)
    return out.reshape(tiles * tb)[:N]


def _sinkhorn_self(x, *, normalize_x=False, block=128):
    N, n, d = x.shape
    tb = _pick_tile(N, block)
    npad = _round_up(N, tb)
    if npad != N:
        x = jnp.pad(x, ((0, npad - N), (0, 0), (0, 0)))
    tiles = npad // tb
    out = pl.pallas_call(
        partial(_sinkhorn_self_kernel, normalize_x=normalize_x),
        out_shape=jax.ShapeDtypeStruct((tiles, 1, tb), jnp.float32),
        grid=(tiles,),
        in_specs=[pl.BlockSpec((tb, n, d), lambda i: (i, 0, 0))],
        out_specs=pl.BlockSpec((1, 1, tb), lambda i: (i, 0, 0)),
        compiler_params=pltpu.CompilerParams(
            dimension_semantics=("parallel",), vmem_limit_bytes=VMEM_LIMIT),
    )(x)
    return out.reshape(tiles * tb)[:N]


def _sinkhorn_batch_neg(centers, negs, *, normalize_x=False, normalize_y=True, block=128):
    B, n, d = centers.shape
    _, neg, _, _ = negs.shape
    tn = _pick_tile(neg, block)
    negpad = _round_up(neg, tn)
    if negpad != neg:
        negs = jnp.pad(negs, ((0, 0), (0, negpad - neg), (0, 0), (0, 0)))
    tiles = negpad // tn
    out = pl.pallas_call(
        partial(_sinkhorn_batchneg_kernel, normalize_x=normalize_x, normalize_y=normalize_y),
        out_shape=jax.ShapeDtypeStruct((B, tiles, 1, tn), jnp.float32),
        grid=(B, tiles),
        in_specs=[pl.BlockSpec((1, n, d), lambda b, j: (b, 0, 0)),       # resident across neg tiles
                  pl.BlockSpec((1, tn, n, d), lambda b, j: (b, j, 0, 0))],
        out_specs=pl.BlockSpec((1, 1, 1, tn), lambda b, j: (b, j, 0, 0)),
        compiler_params=pltpu.CompilerParams(
            dimension_semantics=("parallel", "arbitrary"), vmem_limit_bytes=VMEM_LIMIT),
    )(centers, negs)
    otxy_m = out.reshape(B, tiles * tn)[:, :neg]
    otxx = _sinkhorn_self(centers, normalize_x=normalize_x)              # hoisted: once per query
    return otxy_m - 0.5 * otxx[:, None]


def score_func(centers, embeds2, *, embeds2_raw=True):
    # centers are already L2-normalized query clouds; embeds2 may be raw entity rows
    # (their normalization is folded into the Sinkhorn input load).
    if centers.shape == embeds2.shape:
        return _sinkhorn_pair(centers, embeds2, normalize_x=False, normalize_y=embeds2_raw)
    return _sinkhorn_batch_neg(centers, embeds2, normalize_x=False, normalize_y=embeds2_raw)


# ----------------------- parameter init (deterministic, in-script) -------------------------
def xavier_uniform(key, shape):
    if len(shape) == 2:
        fan_in, fan_out = shape[1], shape[0]
    else:
        rf = 1
        for s in shape[2:]:
            rf *= s
        fan_in, fan_out = shape[1] * rf, shape[0] * rf
    bound = (6.0 / (fan_in + fan_out)) ** 0.5
    return jax.random.uniform(key, shape, jnp.float32, -bound, bound)


# ----------------------- Query2Cloud (JAX orchestration over Pallas kernels) ---------------
class Query2CloudPallas:
    def __init__(self, nentity, nrelation, hidden_dim, n_vec=N_VEC,
                 key=jax.random.PRNGKey(0), query_name_dict=None,
                 param_dtype=jnp.float32):
        # param_dtype=jnp.bfloat16 halves HBM/VMEM traffic on v6e/v7x; kernels accumulate in f32.
        self.nentity = nentity
        self.nrelation = nrelation
        self.d = hidden_dim
        self.n_vec = n_vec
        self.query_name_dict = query_name_dict or {}
        k = jax.random.split(key, 6)
        self.entity_table = jax.random.normal(
            k[0], (nentity, hidden_dim * n_vec), jnp.float32).astype(param_dtype)
        self.proj_mats = xavier_uniform(k[1], (nrelation, hidden_dim, hidden_dim)).astype(param_dtype)
        self.pre_mats = xavier_uniform(k[2], (hidden_dim, hidden_dim)).astype(param_dtype)
        self.post_mats = xavier_uniform(k[3], (hidden_dim, hidden_dim)).astype(param_dtype)
        self.pre_mats2 = xavier_uniform(k[4], (hidden_dim, hidden_dim)).astype(param_dtype)
        post_mats2 = xavier_uniform(k[5], (n_vec, hidden_dim, hidden_dim))
        # flatten (n_vec, d, d) -> (d, n_vec*d) once, so the per-vec bmm is one MXU matmul
        self.post2f = jnp.transpose(post_mats2, (1, 0, 2)).reshape(
            hidden_dim, n_vec * hidden_dim).astype(param_dtype)

    # CloudEncoder: gather (glue) + batched Pallas L2-normalize
    # TODO(synk): the gather could be fused into the normalize kernel via a manual per-row DMA
    # gather (pl.ANY + make_async_copy) to save one more HBM round trip.
    def encode(self, indices):
        emb = jnp.take(self.entity_table, indices.reshape(-1), axis=0)
        return l2_normalize(emb.reshape(-1, self.n_vec, self.d))

    # raw entity rows for the score path; their L2-normalization happens inside the
    # Sinkhorn kernels (saves a full read+write pass over the biggest tensor).
    def encode_raw(self, indices):
        emb = jnp.take(self.entity_table, indices.reshape(-1), axis=0)
        return emb.reshape(-1, self.n_vec, self.d)

    # CloudProjection: relation matrix gathered inside the kernel (scalar-prefetch index_map)
    def project(self, embeds, rels):
        return cloud_projection(embeds, rels, self.proj_mats)

    # CloudIntersection
    def intersect(self, e1, e2, e3=None):
        # TODO(synk): 3-way intersection differs only by averaging 3 clouds; not wired here.
        assert e3 is None
        return cloud_intersection(e1, e2, self.pre_mats, self.post_mats,
                                  self.pre_mats2, self.post2f)

    def calc_query(self, queries, query_structure, idx):
        all_relation_flag = all(ele in ('r', 'n') for ele in query_structure[-1])
        if all_relation_flag:
            if query_structure[0] == 'e':
                embedding = self.encode(queries[:, idx]); idx += 1
            else:
                embedding, idx = self.calc_query(queries, query_structure[0], idx)
            for ele in query_structure[-1]:
                assert ele != 'n', 'vec cannot handle queries with negation'
                embedding = self.project(embedding, queries[:, idx]); idx += 1
        else:
            embs = []
            for sub in query_structure:
                e, idx = self.calc_query(queries, sub, idx)
                embs.append(e)
            embedding = self.intersect(*embs)
        return embedding, idx

    def forward(self, positive_sample, negative_sample, subsampling_weight,
                batch_queries_dict, batch_idxs_dict):
        # TODO(synk): union ('u'/DNF) branch omitted — pure index rearrangement over the
        # same kernels below.
        all_center, all_idxs = [], []
        for qs in batch_queries_dict:
            emb, _ = self.calc_query(batch_queries_dict[qs], qs, 0)
            all_center.append(emb)
            all_idxs.extend(batch_idxs_dict[qs])
        all_center = jnp.concatenate(all_center, axis=0)             # (B, n_vec, d), normalized
        idxs = jnp.asarray(all_idxs, dtype=jnp.int32)

        if subsampling_weight is not None:
            subsampling_weight = subsampling_weight[idxs]

        positive_logit = None
        if positive_sample is not None:
            pos_raw = self.encode_raw(positive_sample[idxs])          # (B, n_vec, d) raw
            positive_logit = score_func(all_center, pos_raw)          # (B,)

        negative_logit = None
        if negative_sample is not None:
            neg = negative_sample[idxs]
            B, neg_size = neg.shape
            neg_raw = self.encode_raw(neg.reshape(-1)).reshape(B, neg_size, self.n_vec, self.d)
            negative_logit = score_func(all_center, neg_raw)          # (B, neg)

        return positive_logit, negative_logit, subsampling_weight, all_idxs


if __name__ == "__main__":
    nentity, nrelation, hidden_dim, n_vec = 64, 8, 32, 8
    query_name_dict = {('e', ('r',)): '1p',
                       (('e', ('r',)), ('e', ('r',))): '2i'}
    model = Query2CloudPallas(nentity, nrelation, hidden_dim, n_vec,
                              key=jax.random.PRNGKey(0), query_name_dict=query_name_dict)

    keys = jax.random.split(jax.random.PRNGKey(1), 8)
    # two 1p queries: [entity, relation]
    q1p = jnp.stack([jax.random.randint(keys[0], (2,), 0, nentity),
                     jax.random.randint(keys[1], (2,), 0, nrelation)], axis=1)
    # two 2i queries: [e, r, e, r]
    q2i = jnp.concatenate([jax.random.randint(keys[2], (2, 1), 0, nentity),
                           jax.random.randint(keys[3], (2, 1), 0, nrelation),
                           jax.random.randint(keys[4], (2, 1), 0, nentity),
                           jax.random.randint(keys[5], (2, 1), 0, nrelation)], axis=1)
    batch_queries_dict = {('e', ('r',)): q1p,
                          (('e', ('r',)), ('e', ('r',))): q2i}
    batch_idxs_dict = {('e', ('r',)): [0, 1],
                       (('e', ('r',)), ('e', ('r',))): [2, 3]}

    positive_sample = jax.random.randint(keys[6], (4,), 0, nentity)
    negative_sample = jax.random.randint(keys[7], (4, 4), 0, nentity)
    subsampling_weight = jax.random.uniform(jax.random.PRNGKey(2), (4,), jnp.float32)

    pos_logit, neg_logit, w, idxs = model.forward(
        positive_sample, negative_sample, subsampling_weight,
        batch_queries_dict, batch_idxs_dict)
    jax.block_until_ready((pos_logit, neg_logit, w))
    assert pos_logit.shape == (4,)
    assert neg_logit.shape == (4, 4)
    assert w.shape == (4,)
    assert bool(jnp.all(jnp.isfinite(pos_logit))) and bool(jnp.all(jnp.isfinite(neg_logit)))
    print("KERNEL_OK")
</pallas_src>

<mosaic_0001>
module attributes {stable_mosaic.version = 11 : i64} {
  func.func @_normalize_kernel(%arg0: i32, %arg1: memref<16x32xf32, #tpu.memory_space<vmem>>, %arg2: memref<16x32xf32, #tpu.memory_space<vmem>>) attributes {dimension_semantics = [#tpu.dimension_semantics<parallel>], iteration_bounds = array<i64: 1>, scalar_prefetch = 0 : i64, scratch_operands = 0 : i64, tpu.core_type = #tpu.core_type<tc>, window_params = [{transform_indices = @transform_0, window_bounds = array<i64: 16, 32>}, {transform_indices = @transform_1, window_bounds = array<i64: 16, 32>}]} {
    %c0 = arith.constant 0 : index
    %c0_0 = arith.constant 0 : index
    %0 = vector.load %arg1[%c0, %c0_0] : memref<16x32xf32, #tpu.memory_space<vmem>>, vector<16x32xf32>
    %1 = arith.mulf %0, %0 : vector<16x32xf32>
    %cst = arith.constant dense<0.000000e+00> : vector<16xf32>
    %2 = vector.multi_reduction <add>, %1, %cst [1] : vector<16x32xf32> to vector<16xf32>
    %3 = vector.shape_cast %2 : vector<16xf32> to vector<16x1xf32>
    %cst_1 = arith.constant 9.99999996E-13 : f32
    %4 = vector.broadcast %cst_1 : f32 to vector<16x1xf32>
    %5 = arith.addf %3, %4 : vector<16x1xf32>
    %6 = math.rsqrt %5 : vector<16x1xf32>
    %7 = vector.broadcast %6 : vector<16x1xf32> to vector<16x32xf32>
    %8 = arith.mulf %0, %7 : vector<16x32xf32>
    %c0_2 = arith.constant 0 : index
    %c0_3 = arith.constant 0 : index
    %9 = vector.load %arg2[%c0_2, %c0_3] : memref<16x32xf32, #tpu.memory_space<vmem>>, vector<16x32xf32>
    tpu.vector_store %arg2[%c0_2, %c0_3], %8 {strides = array<i32>} : memref<16x32xf32, #tpu.memory_space<vmem>>, vector<16x32xf32>,
    return
  }
  func.func @transform_0(%arg0: i32) -> (i32, i32) {
    %c0_i32 = arith.constant 0 : i32
    %c0_i32_0 = arith.constant 0 : i32
    return %arg0, %c0_i32 : i32, i32
  }
  func.func @transform_1(%arg0: i32) -> (i32, i32) {
    %c0_i32 = arith.constant 0 : i32
    %c0_i32_0 = arith.constant 0 : i32
    return %arg0, %c0_i32 : i32, i32
  }
}

</mosaic_0001>

<llo_original>
// kernel: tpu_custom_call.1
$region0: #{tpu_custom_call.1}
  #allocation0 [shape = 'u32[]', space=smem, size = 0x4, offset = 0x4, fixed_abs, tag = 'smem constant byte address 0x4 - core index']
  #allocation1 [shape = 'u32[144,128]{1,0:T(1,128)}', space=vmem, size = 0x12000, scoped, tag = 'internal scratch']
  %s0 = inlined_call_operand.hbm [shape: f32[16,32], index: 0, kind: input, shape index: {}]
  %s1 = inlined_call_operand.hbm [shape: f32[16,32], index: 1, kind: output, shape index: {}]
  %s2 = sld [smem:[#allocation0]]
  $region18: #{tpu_custom_call.1} parent=0
    _
  %s4 = ssub.s32 1, %s2
  %s5 = scalar_select 0, %s4, %s2
  $region1: #{tpu_custom_call.1} parent=0
    #allocation2 [shape = 'u8[8192]{0}', space=vmem, size = 0x2000, scoped, tag = 'input window, operand 0, single buffered']
    #allocation3 [shape = 's32[1]{0}', space=sflag, size = 0x4, scoped, tag = 'scoped memory for tpu_custom_call.1']
    #allocation4 [shape = 's32[1]{0}', space=sflag, size = 0x4, scoped, tag = 'scoped memory for tpu_custom_call.1']
    #allocation5 [shape = 'u8[8192]{0}', space=vmem, size = 0x2000, scoped, tag = 'output window, operand 0, single buffered']
    %6 = vsyncpa [#allocation3], 0
    %7 = vsyncpa [#allocation4], 0
    // Predicated region
    $region2: #{tpu_custom_call.1} parent=1 // pred_check
      _
    $region3: #{tpu_custom_call.1} parent=1 // pred_check_branch
      %9 = sbr.rel (0) target = $region5
    $region4: #{tpu_custom_call.1} parent=1 // pred_region
      %s11 = ssub.s32 256, 256
      %12 = vsyncadd [#allocation3], %s11
      %s13 = sshll.u32 [#allocation2], 4
      %s14 = int_to_ptr.vmem [resolvable:$true] %s13
      %19 = dma.hbm_to_vmem [thread:$0]  %s0, 256, %s14, [#allocation3], 128, 128, 8
    $region5: #{tpu_custom_call.1} parent=1 // pred_fallthru
      _
    // Predicated region
    $region6: #{tpu_custom_call.1} parent=1 // pred_check
      _
    $region7: #{tpu_custom_call.1} parent=1 // pred_check_branch
      %21 = sbr.rel (0) target = $region9
    $region8: #{tpu_custom_call.1} parent=1 // pred_region
      %22 = dma.done [#allocation3], 256
    $region9: #{tpu_custom_call.1} parent=1 // pred_fallthru
      _
    %v23 = vld [vmem:[#allocation2] sm:$0xff]
    %v24 = vld [vmem:[#allocation2 + $0x8] sm:$0xff]
    %v25 = vmul.f32 %v23, %v23
    %v26 = vmul.f32 %v24, %v24
    %vm27 = vcmask 261120
    %v28 = vsel %vm27, %v25, 0.0
    %29 = vadd.xlane.f32.xlu0 %v28
    %v30 = vpop.xlane.xlu0 %29
    %v31 = vsel %vm27, %v26, 0.0
    %32 = vadd.xlane.f32.xlu0 %v31
    %v33 = vpop.xlane.xlu0 %32
    %v34 = vadd.f32 %v30, 1e-12
    %v35 = vadd.f32 %v33, 1e-12
    %v36 = vrsqrt.pop %v34
    %v37 = vrsqrt.pop %v35
    %v38 = vmul.f32 %v23, %v36
    %v39 = vmul.f32 %v24, %v37
    %40 = vst.msk [vmem:[#allocation5] sm:$0xff] %vm27, %v38
    %41 = vst.msk [vmem:[#allocation5 + $0x8] sm:$0xff] %vm27, %v39
    // Predicated region
    $region10: #{tpu_custom_call.1} parent=1 // pred_check
      _
    $region11: #{tpu_custom_call.1} parent=1 // pred_check_branch
      %43 = sbr.rel (0) target = $region13
    $region12: #{tpu_custom_call.1} parent=1 // pred_region
      %s45 = ssub.s32 256, 256
      %46 = vsyncadd [#allocation4], %s45
      %s47 = sshll.u32 [#allocation5], 4
      %s48 = int_to_ptr.vmem [resolvable:$true] %s47
      %53 = dma.vmem_to_hbm [thread:$0]  %s48, 256, %s1, [#allocation4], 128, 128, 8
    $region13: #{tpu_custom_call.1} parent=1 // pred_fallthru
      _
    // Predicated region
    $region14: #{tpu_custom_call.1} parent=1 // pred_check
      _
    $region15: #{tpu_custom_call.1} parent=1 // pred_check_branch
      %55 = sbr.rel (0) target = $region17
    $region16: #{tpu_custom_call.1} parent=1 // pred_region
      %56 = dma.done [#allocation4], 256
    $region17: #{tpu_custom_call.1} parent=1 // pred_fallthru
      _
    %57 = vsyncpa [#allocation3], 1
    %58 = vsyncpa [#allocation4], 1

</llo_original>
